<compile_context>
chip_gen: v7x
topology: tpu7x:2x2x1
jax: 0.10.0
libtpu: 0.0.40
codegen_flags: <defaults>
</compile_context>

<pallas_src>
import jax
import jax.numpy as jnp
import numpy as np
from jax.experimental import pallas as pl
from jax.experimental.pallas import tpu as pltpu  # noqa: F401  (TPU backend)

K = 3          # kernel size
STRIDE = 1
PADDING = 1
OUTPUT_PADDING = 0


def convt1d_kernel(x_ref, w_ref, b_ref, o_ref):
    # x_ref: (N, C_in*L)   w_ref: (C_in*L, C_out*L_out)   b_ref: (1, C_out*L_out)
    # o_ref: (N, C_out*L_out)  -- row-major identical to final (N, C_out, L_out)
    acc = jnp.dot(
        x_ref[...].astype(jnp.float32),
        w_ref[...].astype(jnp.float32),
        preferred_element_type=jnp.float32,
        precision=jax.lax.Precision.HIGHEST,
    )
    acc = acc + b_ref[...].astype(jnp.float32)
    o_ref[...] = acc.astype(o_ref.dtype)


def prepare_params(weight, bias, L):
    """weight: (C_in, C_out, K) PyTorch ConvTranspose1d layout; bias: (C_out,).

    Builds, ONCE (outside the jitted forward path):
      w_big[(c, s), (o, l)] = weight[c, o, l - s*stride + padding]  (0 if tap invalid)
      b_big[0, (o, l)]      = bias[o]
    so that  y[n, o, l] = x[n, c, s] @ w_big + b_big  in one 2-D matmul.
    """
    w = np.asarray(weight, dtype=np.float32)
    b = np.asarray(bias, dtype=np.float32)
    C_in, C_out, Kk = w.shape
    assert Kk == K
    L_out = (L - 1) * STRIDE - 2 * PADDING + K + OUTPUT_PADDING

    w_big = np.zeros((C_in, L, C_out, L_out), dtype=np.float32)
    for s in range(L):
        for l in range(L_out):
            k = l - s * STRIDE + PADDING
            if 0 <= k < K:
                w_big[:, s, :, l] = w[:, :, k]
    w_big = w_big.reshape(C_in * L, C_out * L_out)

    b_big = np.tile(b.reshape(C_out, 1), (1, L_out)).reshape(1, C_out * L_out)
    return jnp.asarray(w_big), jnp.asarray(b_big)


@jax.jit
def conv_transpose1d_forward(x, w_big, b_big):
    """x: (N, C_in, L) NCL.  Returns (N, C_out, L_out) NCL."""
    N, C_in, L = x.shape
    CinL, CoutLout = w_big.shape
    assert CinL == C_in * L
    L_out = (L - 1) * STRIDE - 2 * PADDING + K + OUTPUT_PADDING
    C_out = CoutLout // L_out

    x2 = x.reshape(N, C_in * L)  # row-major merge of trailing dims: bitcast, no copy

    y2 = pl.pallas_call(
        convt1d_kernel,
        out_shape=jax.ShapeDtypeStruct((N, CoutLout), x.dtype),
        in_specs=[
            pl.BlockSpec((N, CinL), lambda: (0, 0)),
            pl.BlockSpec((CinL, CoutLout), lambda: (0, 0)),
            pl.BlockSpec((1, CoutLout), lambda: (0, 0)),
        ],
        out_specs=pl.BlockSpec((N, CoutLout), lambda: (0, 0)),
    )(x2, w_big, b_big)

    # Row-major split of the trailing dim: bitcast, no copy, no transpose.
    return y2.reshape(N, C_out, L_out)


def reference_conv_transpose1d(x, weight, bias):
    """Direct-sum PyTorch-semantics reference (tiny shapes)."""
    x = np.asarray(x)
    w = np.asarray(weight)
    b = np.asarray(bias)
    N, C_in, L = x.shape
    _, C_out, Kk = w.shape
    L_out = (L - 1) * STRIDE - 2 * PADDING + Kk + OUTPUT_PADDING
    y = np.tile(b.reshape(1, C_out, 1), (N, 1, L_out)).astype(np.float32)
    for n in range(N):
        for o in range(C_out):
            for t in range(L_out):
                s_acc = 0.0
                for c in range(C_in):
                    for k in range(Kk):
                        s = t + PADDING - k
                        if 0 <= s < L:
                            s_acc += x[n, c, s] * w[c, o, k]
                y[n, o, t] += s_acc
    return y


if __name__ == "__main__":
    key = jax.random.PRNGKey(0)
    kx, kw, kb = jax.random.split(key, 3)

    # Module-implied shapes: x1 = (8, 2, 4); ConvTranspose1d(2, 10, k=3)
    N, C_in, L, C_out = 8, 2, 4, 10
    x = jax.random.normal(kx, (N, C_in, L), dtype=jnp.float32)
    bound = 1.0 / np.sqrt(C_in * K)
    weight = jax.random.uniform(kw, (C_in, C_out, K), jnp.float32, -bound, bound)
    bias = jax.random.uniform(kb, (C_out,), jnp.float32, -bound, bound)

    # One-time parameter preprocessing (folds flip + im2col structure + layout).
    w_big, b_big = prepare_params(weight, bias, L)

    y = conv_transpose1d_forward(x, w_big, b_big)
    y = jax.block_until_ready(y)

    y_ref = reference_conv_transpose1d(x, weight, bias)
    L_out = (L - 1) * STRIDE - 2 * PADDING + K + OUTPUT_PADDING
    assert y.shape == (N, C_out, L_out)
    np.testing.assert_allclose(np.asarray(y), y_ref, rtol=1e-4, atol=1e-4)

    print("KERNEL_OK")
</pallas_src>

<mosaic_0001>
module attributes {stable_mosaic.version = 11 : i64} {
  func.func @convt1d_kernel(%arg0: memref<8x8xf32, #tpu.memory_space<vmem>>, %arg1: memref<8x40xf32, #tpu.memory_space<vmem>>, %arg2: memref<1x40xf32, #tpu.memory_space<vmem>>, %arg3: memref<8x40xf32, #tpu.memory_space<vmem>>) attributes {dimension_semantics = [], scalar_prefetch = 0 : i64, scratch_operands = 0 : i64, tpu.core_type = #tpu.core_type<tc>} {
    %c0 = arith.constant 0 : index
    %c0_0 = arith.constant 0 : index
    %0 = vector.load %arg0[%c0, %c0_0] : memref<8x8xf32, #tpu.memory_space<vmem>>, vector<8x8xf32>
    %c0_1 = arith.constant 0 : index
    %c0_2 = arith.constant 0 : index
    %1 = vector.load %arg1[%c0_1, %c0_2] : memref<8x40xf32, #tpu.memory_space<vmem>>, vector<8x40xf32>
    %cst = arith.constant dense<0.000000e+00> : vector<8x40xf32>
    %2 = tpu.matmul %0, %1, %cst {dimension_numbers = #tpu.dot_dimension_numbers<[1], [0], [0], [1], [0, 0, 1, 1], [], []>, precision = #tpu.contract_precision<fp32>} : vector<8x8xf32>, vector<8x40xf32>, vector<8x40xf32> -> vector<8x40xf32>
    %c0_3 = arith.constant 0 : index
    %c0_4 = arith.constant 0 : index
    %3 = vector.load %arg2[%c0_3, %c0_4] : memref<1x40xf32, #tpu.memory_space<vmem>>, vector<1x40xf32>
    %4 = vector.broadcast %3 : vector<1x40xf32> to vector<8x40xf32>
    %5 = arith.addf %2, %4 : vector<8x40xf32>
    %c0_5 = arith.constant 0 : index
    %c0_6 = arith.constant 0 : index
    %6 = vector.load %arg3[%c0_5, %c0_6] : memref<8x40xf32, #tpu.memory_space<vmem>>, vector<8x40xf32>
    tpu.vector_store %arg3[%c0_5, %c0_6], %5 {strides = array<i32>} : memref<8x40xf32, #tpu.memory_space<vmem>>, vector<8x40xf32>,
    return
  }
}

</mosaic_0001>

<llo_original>
// kernel: conv_transpose1d_forward.1
$region0: #{conv_transpose1d_forward.1}
  #allocation0 [shape = 'u32[]', space=smem, size = 0x4, offset = 0x4, fixed_abs, tag = 'smem constant byte address 0x4 - core index']
  #allocation1 [shape = 'u32[144,128]{1,0:T(1,128)}', space=vmem, size = 0x12000, scoped, tag = 'internal scratch']
  %s0 = inlined_call_operand.vmem [shape: f32[8,8], index: 0, kind: input, shape index: {}]
  %s1 = inlined_call_operand.vmem [shape: f32[8,40], index: 1, kind: input, shape index: {}]
  %s2 = inlined_call_operand.vmem [shape: f32[1,40], index: 2, kind: input, shape index: {}]
  %s3 = inlined_call_operand.vmem [shape: f32[8,40], index: 3, kind: output, shape index: {}]
  %s4 = sld [smem:[#allocation0]]
  $region22: #{conv_transpose1d_forward.1} parent=0
    _
  %s6 = ssub.s32 1, %s4
  %s7 = scalar_select 0, %s6, %s4
  // Predicated region
  $region2: #{conv_transpose1d_forward.1} parent=0 // pred_check
    _
  $region3: #{conv_transpose1d_forward.1} parent=0 // pred_check_branch
    %9 = sbr.rel (0) target = $region5
  $region4: #{conv_transpose1d_forward.1} parent=0 // pred_region
    _
  $region5: #{conv_transpose1d_forward.1} parent=0 // pred_fallthru
    _
  // Predicated region
  $region6: #{conv_transpose1d_forward.1} parent=0 // pred_check
    _
  $region7: #{conv_transpose1d_forward.1} parent=0 // pred_check_branch
    %11 = sbr.rel (0) target = $region9
  $region8: #{conv_transpose1d_forward.1} parent=0 // pred_region
    _
  $region9: #{conv_transpose1d_forward.1} parent=0 // pred_fallthru
    _
  // Predicated region
  $region10: #{conv_transpose1d_forward.1} parent=0 // pred_check
    _
  $region11: #{conv_transpose1d_forward.1} parent=0 // pred_check_branch
    %13 = sbr.rel (0) target = $region13
  $region12: #{conv_transpose1d_forward.1} parent=0 // pred_region
    _
  $region13: #{conv_transpose1d_forward.1} parent=0 // pred_fallthru
    _
  %v14 = vld [vmem:[%s0] sm:$0xff]
  %v15 = vld [vmem:[%s1] sm:$0xff]
  %v16 = vld [vmem:[%s2] sm:$0x1]
  %v18 = vlaneseq
  %v19 = vshrl.u32 %v18, 7
  %v20 = vsub.s32 0, %v19
  %v21 = vrot.slane %v16, %v20
  %vm23 = vcmask 64512
  %v25 = vsel %vm23, %v14, 0
  %27 = vmatprep.subr.mxu0 0.0
  %v28 = vand.u32 %v15, 4294901760
  %29 = vmatpush1.msra.mxu0 %v28
  %30 = vmatprep.subr.mxu0 0.0
  %31 = vmatpush1.msra.mxu0 0.0
  %32 = vmatprep.subr.mxu0 0.0
  %33 = vmatpush1.msra.mxu0 0.0
  %34 = vmatprep.subr.mxu0 0.0
  %35 = vmatpush1.msra.mxu0 0.0
  %36 = vmatprep.subr.mxu0 0.0
  %37 = vmatpush1.msra.mxu0 0.0
  %38 = vmatprep.subr.mxu0 0.0
  %39 = vmatpush1.msra.mxu0 0.0
  %40 = vmatprep.subr.mxu0 0.0
  %41 = vmatpush1.msra.mxu0 0.0
  %42 = vmatprep.subr.mxu0 0.0
  %43 = vmatpush1.msra.mxu0 0.0
  %44 = vmatprep.subr.mxu0 0.0
  %45 = vmatpush1.msra.mxu0 0.0
  %46 = vmatprep.subr.mxu0 0.0
  %47 = vmatpush1.msra.mxu0 0.0
  %48 = vmatprep.subr.mxu0 0.0
  %49 = vmatpush1.msra.mxu0 0.0
  %50 = vmatprep.subr.mxu0 0.0
  %51 = vmatpush1.msra.mxu0 0.0
  %52 = vmatprep.subr.mxu0 0.0
  %53 = vmatpush1.msra.mxu0 0.0
  %54 = vmatprep.subr.mxu0 0.0
  %55 = vmatpush1.msra.mxu0 0.0
  %56 = vmatprep.subr.mxu0 0.0
  %57 = vmatpush1.msra.mxu0 0.0
  %58 = vmatprep.subr.mxu0 0.0
  %59 = vmatpush1.msra.mxu0 0.0
  %60 = vmatprep.subr.mxu0 0.0
  %61 = vmatpush1.msra.mxu0 0.0
  %62 = vmatprep.subr.mxu0 0.0
  %63 = vmatpush1.msra.mxu0 0.0
  %64 = vmatprep.subr.mxu0 0.0
  %65 = vmatpush1.msra.mxu0 0.0
  %66 = vmatprep.subr.mxu0 0.0
  %67 = vmatpush1.msra.mxu0 0.0
  %68 = vmatprep.subr.mxu0 0.0
  %69 = vmatpush1.msra.mxu0 0.0
  %70 = vmatprep.subr.mxu0 0.0
  %71 = vmatpush1.msra.mxu0 0.0
  %72 = vmatprep.subr.mxu0 0.0
  %73 = vmatpush1.msra.mxu0 0.0
  %74 = vmatprep.subr.mxu0 0.0
  %75 = vmatpush1.msra.mxu0 0.0
  %76 = vmatprep.subr.mxu0 0.0
  %77 = vmatpush1.msra.mxu0 0.0
  %78 = vmatprep.subr.mxu0 0.0
  %79 = vmatpush1.msra.mxu0 0.0
  %80 = vmatprep.subr.mxu0 0.0
  %81 = vmatpush1.msra.mxu0 0.0
  %82 = vmatprep.subr.mxu0 0.0
  %83 = vmatpush1.msra.mxu0 0.0
  %84 = vmatprep.subr.mxu0 0.0
  %85 = vmatpush1.msra.mxu0 0.0
  %86 = vmatprep.subr.mxu0 0.0
  %87 = vmatpush1.msra.mxu0 0.0
  %88 = vmatprep.subr.mxu0 0.0
  %89 = vmatpush1.msra.mxu0 0.0
  %90 = vmatprep.subr.mxu0 0.0
  %91 = vmatpush1.msra.mxu0 0.0
  %92 = vmatprep.mubr.f32.mxu0 0.0
  %v93 = vand.u32 %v25, 4294901760
  %v94 = vsub.f32 %v25, %v93
  %v95 = vand.u32 %v94, 4294901760
  %v96 = vsub.f32 %v94, %v95
  %v97 = vand.u32 %v96, 4294901760
  %98 = vmatmul.mubr.f32.gmra.mrb[0].mxu0 %v97
  %v99 = vpop.f32.mrb[0].mxu0
  %v100 = vadd.f32 %v21, %v99
  %v101 = vpop.f32.mrb[0].mxu0
  %102 = vdwg.mxu0
  %103 = vmatprep.subr.mxu0 0.0
  %v104 = vand.u32 %v15, 4294901760
  %v105 = vsub.f32 %v15, %v104
  %v106 = vand.u32 %v105, 4294901760
  %v107 = vsub.f32 %v105, %v106
  %v108 = vand.u32 %v107, 4294901760
  %109 = vmatpush1.msra.mxu0 %v108
  %110 = vmatprep.subr.mxu0 0.0
  %111 = vmatpush1.msra.mxu0 0.0
  %112 = vmatprep.subr.mxu0 0.0
  %113 = vmatpush1.msra.mxu0 0.0
  %114 = vmatprep.subr.mxu0 0.0
  %115 = vmatpush1.msra.mxu0 0.0
  %116 = vmatprep.subr.mxu0 0.0
  %117 = vmatpush1.msra.mxu0 0.0
  %118 = vmatprep.subr.mxu0 0.0
  %119 = vmatpush1.msra.mxu0 0.0
  %120 = vmatprep.subr.mxu0 0.0
  %121 = vmatpush1.msra.mxu0 0.0
  %122 = vmatprep.subr.mxu0 0.0
  %123 = vmatpush1.msra.mxu0 0.0
  %124 = vmatprep.subr.mxu0 0.0
  %125 = vmatpush1.msra.mxu0 0.0
  %126 = vmatprep.subr.mxu0 0.0
  %127 = vmatpush1.msra.mxu0 0.0
  %128 = vmatprep.subr.mxu0 0.0
  %129 = vmatpush1.msra.mxu0 0.0
  %130 = vmatprep.subr.mxu0 0.0
  %131 = vmatpush1.msra.mxu0 0.0
  %132 = vmatprep.subr.mxu0 0.0
  %133 = vmatpush1.msra.mxu0 0.0
  %134 = vmatprep.subr.mxu0 0.0
  %135 = vmatpush1.msra.mxu0 0.0
  %136 = vmatprep.subr.mxu0 0.0
  %137 = vmatpush1.msra.mxu0 0.0
  %138 = vmatprep.subr.mxu0 0.0
  %139 = vmatpush1.msra.mxu0 0.0
  %140 = vmatprep.subr.mxu0 0.0
  %141 = vmatpush1.msra.mxu0 0.0
  %142 = vmatprep.subr.mxu0 0.0
  %143 = vmatpush1.msra.mxu0 0.0
  %144 = vmatprep.subr.mxu0 0.0
  %145 = vmatpush1.msra.mxu0 0.0
  %146 = vmatprep.subr.mxu0 0.0
  %147 = vmatpush1.msra.mxu0 0.0
  %148 = vmatprep.subr.mxu0 0.0
  %149 = vmatpush1.msra.mxu0 0.0
  %150 = vmatprep.subr.mxu0 0.0
  %151 = vmatpush1.msra.mxu0 0.0
  %152 = vmatprep.subr.mxu0 0.0
  %153 = vmatpush1.msra.mxu0 0.0
  %154 = vmatprep.subr.mxu0 0.0
  %155 = vmatpush1.msra.mxu0 0.0
  %156 = vmatprep.subr.mxu0 0.0
  %157 = vmatpush1.msra.mxu0 0.0
  %158 = vmatprep.subr.mxu0 0.0
  %159 = vmatpush1.msra.mxu0 0.0
  %160 = vmatprep.subr.mxu0 0.0
  %161 = vmatpush1.msra.mxu0 0.0
  %162 = vmatprep.subr.mxu0 0.0
  %163 = vmatpush1.msra.mxu0 0.0
  %164 = vmatprep.subr.mxu0 0.0
  %165 = vmatpush1.msra.mxu0 0.0
  %166 = vmatprep.subr.mxu0 0.0
  %167 = vmatpush1.msra.mxu0 0.0
  %168 = vmatprep.subr.mxu0 0.0
  %169 = vmatpush1.msra.mxu0 0.0
  %170 = vmatprep.subr.mxu0 0.0
  %171 = vmatpush1.msra.mxu0 0.0
  %172 = vmatprep.mubr.f32.mxu0 0.0
  %v173 = vand.u32 %v25, 4294901760
  %174 = vmatmul.mubr.f32.gmra.mrb[0].mxu0 %v173
  %v175 = vpop.f32.mrb[0].mxu0
  %v176 = vadd.f32 %v100, %v175
  %v177 = vpop.f32.mrb[0].mxu0
  %178 = vdwg.mxu0
  %179 = vmatprep.subr.mxu0 0.0
  %v180 = vand.u32 %v15, 4294901760
  %v181 = vsub.f32 %v15, %v180
  %182 = vmatpush1.msra.mxu0 %v181
  %183 = vmatprep.subr.mxu0 0.0
  %184 = vmatpush1.msra.mxu0 0.0
  %185 = vmatprep.subr.mxu0 0.0
  %186 = vmatpush1.msra.mxu0 0.0
  %187 = vmatprep.subr.mxu0 0.0
  %188 = vmatpush1.msra.mxu0 0.0
  %189 = vmatprep.subr.mxu0 0.0
  %190 = vmatpush1.msra.mxu0 0.0
  %191 = vmatprep.subr.mxu0 0.0
  %192 = vmatpush1.msra.mxu0 0.0
  %193 = vmatprep.subr.mxu0 0.0
  %194 = vmatpush1.msra.mxu0 0.0
  %195 = vmatprep.subr.mxu0 0.0
  %196 = vmatpush1.msra.mxu0 0.0
  %197 = vmatprep.subr.mxu0 0.0
  %198 = vmatpush1.msra.mxu0 0.0
  %199 = vmatprep.subr.mxu0 0.0
  %200 = vmatpush1.msra.mxu0 0.0
  %201 = vmatprep.subr.mxu0 0.0
  %202 = vmatpush1.msra.mxu0 0.0
  %203 = vmatprep.subr.mxu0 0.0
  %204 = vmatpush1.msra.mxu0 0.0
  %205 = vmatprep.subr.mxu0 0.0
  %206 = vmatpush1.msra.mxu0 0.0
  %207 = vmatprep.subr.mxu0 0.0
  %208 = vmatpush1.msra.mxu0 0.0
  %209 = vmatprep.subr.mxu0 0.0
  %210 = vmatpush1.msra.mxu0 0.0
  %211 = vmatprep.subr.mxu0 0.0
  %212 = vmatpush1.msra.mxu0 0.0
  %213 = vmatprep.subr.mxu0 0.0
  %214 = vmatpush1.msra.mxu0 0.0
  %215 = vmatprep.subr.mxu0 0.0
  %216 = vmatpush1.msra.mxu0 0.0
  %217 = vmatprep.subr.mxu0 0.0
  %218 = vmatpush1.msra.mxu0 0.0
  %219 = vmatprep.subr.mxu0 0.0
  %220 = vmatpush1.msra.mxu0 0.0
  %221 = vmatprep.subr.mxu0 0.0
  %222 = vmatpush1.msra.mxu0 0.0
  %223 = vmatprep.subr.mxu0 0.0
  %224 = vmatpush1.msra.mxu0 0.0
  %225 = vmatprep.subr.mxu0 0.0
  %226 = vmatpush1.msra.mxu0 0.0
  %227 = vmatprep.subr.mxu0 0.0
  %228 = vmatpush1.msra.mxu0 0.0
  %229 = vmatprep.subr.mxu0 0.0
  %230 = vmatpush1.msra.mxu0 0.0
  %231 = vmatprep.subr.mxu0 0.0
  %232 = vmatpush1.msra.mxu0 0.0
  %233 = vmatprep.subr.mxu0 0.0
  %234 = vmatpush1.msra.mxu0 0.0
  %235 = vmatprep.subr.mxu0 0.0
  %236 = vmatpush1.msra.mxu0 0.0
  %237 = vmatprep.subr.mxu0 0.0
  %238 = vmatpush1.msra.mxu0 0.0
  %239 = vmatprep.subr.mxu0 0.0
  %240 = vmatpush1.msra.mxu0 0.0
  %241 = vmatprep.subr.mxu0 0.0
  %242 = vmatpush1.msra.mxu0 0.0
  %243 = vmatprep.subr.mxu0 0.0
  %244 = vmatpush1.msra.mxu0 0.0
  %245 = vmatprep.mubr.f32.mxu0 0.0
  %v246 = vand.u32 %v25, 4294901760
  %v247 = vsub.f32 %v25, %v246
  %248 = vmatmul.mubr.f32.gmra.mrb[0].mxu0 %v247
  %v249 = vpop.f32.mrb[0].mxu0
  %v250 = vadd.f32 %v176, %v249
  %v251 = vpop.f32.mrb[0].mxu0
  %252 = vdwg.mxu0
  %253 = vmatprep.subr.mxu0 0.0
  %v254 = vand.u32 %v15, 4294901760
  %255 = vmatpush1.msra.mxu0 %v254
  %256 = vmatprep.subr.mxu0 0.0
  %257 = vmatpush1.msra.mxu0 0.0
  %258 = vmatprep.subr.mxu0 0.0
  %259 = vmatpush1.msra.mxu0 0.0
  %260 = vmatprep.subr.mxu0 0.0
  %261 = vmatpush1.msra.mxu0 0.0
  %262 = vmatprep.subr.mxu0 0.0
  %263 = vmatpush1.msra.mxu0 0.0
  %264 = vmatprep.subr.mxu0 0.0
  %265 = vmatpush1.msra.mxu0 0.0
  %266 = vmatprep.subr.mxu0 0.0
  %267 = vmatpush1.msra.mxu0 0.0
  %268 = vmatprep.subr.mxu0 0.0
  %269 = vmatpush1.msra.mxu0 0.0
  %270 = vmatprep.subr.mxu0 0.0
  %271 = vmatpush1.msra.mxu0 0.0
  %272 = vmatprep.subr.mxu0 0.0
  %273 = vmatpush1.msra.mxu0 0.0
  %274 = vmatprep.subr.mxu0 0.0
  %275 = vmatpush1.msra.mxu0 0.0
  %276 = vmatprep.subr.mxu0 0.0
  %277 = vmatpush1.msra.mxu0 0.0
  %278 = vmatprep.subr.mxu0 0.0
  %279 = vmatpush1.msra.mxu0 0.0
  %280 = vmatprep.subr.mxu0 0.0
  %281 = vmatpush1.msra.mxu0 0.0
  %282 = vmatprep.subr.mxu0 0.0
  %283 = vmatpush1.msra.mxu0 0.0
  %284 = vmatprep.subr.mxu0 0.0
  %285 = vmatpush1.msra.mxu0 0.0
  %286 = vmatprep.subr.mxu0 0.0
  %287 = vmatpush1.msra.mxu0 0.0
  %288 = vmatprep.subr.mxu0 0.0
  %289 = vmatpush1.msra.mxu0 0.0
  %290 = vmatprep.subr.mxu0 0.0
  %291 = vmatpush1.msra.mxu0 0.0
  %292 = vmatprep.subr.mxu0 0.0
  %293 = vmatpush1.msra.mxu0 0.0
  %294 = vmatprep.subr.mxu0 0.0
  %295 = vmatpush1.msra.mxu0 0.0
  %296 = vmatprep.subr.mxu0 0.0
  %297 = vmatpush1.msra.mxu0 0.0
  %298 = vmatprep.subr.mxu0 0.0
  %299 = vmatpush1.msra.mxu0 0.0
  %300 = vmatprep.subr.mxu0 0.0
  %301 = vmatpush1.msra.mxu0 0.0
  %302 = vmatprep.subr.mxu0 0.0
  %303 = vmatpush1.msra.mxu0 0.0
  %304 = vmatprep.subr.mxu0 0.0
  %305 = vmatpush1.msra.mxu0 0.0
  %306 = vmatprep.subr.mxu0 0.0
  %307 = vmatpush1.msra.mxu0 0.0
  %308 = vmatprep.subr.mxu0 0.0
  %309 = vmatpush1.msra.mxu0 0.0
  %310 = vmatprep.subr.mxu0 0.0
  %311 = vmatpush1.msra.mxu0 0.0
  %312 = vmatprep.subr.mxu0 0.0
  %313 = vmatpush1.msra.mxu0 0.0
  %314 = vmatprep.subr.mxu0 0.0
  %315 = vmatpush1.msra.mxu0 0.0
  %316 = vmatprep.subr.mxu0 0.0
  %317 = vmatpush1.msra.mxu0 0.0
  %318 = vmatprep.mubr.f32.mxu0 0.0
  %v319 = vand.u32 %v25, 4294901760
  %v320 = vsub.f32 %v25, %v319
  %v321 = vand.u32 %v320, 4294901760
  %322 = vmatmul.mubr.f32.gmra.mrb[0].mxu0 %v321
  %v323 = vpop.f32.mrb[0].mxu0
  %v324 = vadd.f32 %v250, %v323
  %v325 = vpop.f32.mrb[0].mxu0
  %326 = vdwg.mxu0
  %327 = vmatprep.subr.mxu0 0.0
  %v328 = vand.u32 %v15, 4294901760
  %v329 = vsub.f32 %v15, %v328
  %v330 = vand.u32 %v329, 4294901760
  %331 = vmatpush1.msra.mxu0 %v330
  %332 = vmatprep.subr.mxu0 0.0
  %333 = vmatpush1.msra.mxu0 0.0
  %334 = vmatprep.subr.mxu0 0.0
  %335 = vmatpush1.msra.mxu0 0.0
  %336 = vmatprep.subr.mxu0 0.0
  %337 = vmatpush1.msra.mxu0 0.0
  %338 = vmatprep.subr.mxu0 0.0
  %339 = vmatpush1.msra.mxu0 0.0
  %340 = vmatprep.subr.mxu0 0.0
  %341 = vmatpush1.msra.mxu0 0.0
  %342 = vmatprep.subr.mxu0 0.0
  %343 = vmatpush1.msra.mxu0 0.0
  %344 = vmatprep.subr.mxu0 0.0
  %345 = vmatpush1.msra.mxu0 0.0
  %346 = vmatprep.subr.mxu0 0.0
  %347 = vmatpush1.msra.mxu0 0.0
  %348 = vmatprep.subr.mxu0 0.0
  %349 = vmatpush1.msra.mxu0 0.0
  %350 = vmatprep.subr.mxu0 0.0
  %351 = vmatpush1.msra.mxu0 0.0
  %352 = vmatprep.subr.mxu0 0.0
  %353 = vmatpush1.msra.mxu0 0.0
  %354 = vmatprep.subr.mxu0 0.0
  %355 = vmatpush1.msra.mxu0 0.0
  %356 = vmatprep.subr.mxu0 0.0
  %357 = vmatpush1.msra.mxu0 0.0
  %358 = vmatprep.subr.mxu0 0.0
  %359 = vmatpush1.msra.mxu0 0.0
  %360 = vmatprep.subr.mxu0 0.0
  %361 = vmatpush1.msra.mxu0 0.0
  %362 = vmatprep.subr.mxu0 0.0
  %363 = vmatpush1.msra.mxu0 0.0
  %364 = vmatprep.subr.mxu0 0.0
  %365 = vmatpush1.msra.mxu0 0.0
  %366 = vmatprep.subr.mxu0 0.0
  %367 = vmatpush1.msra.mxu0 0.0
  %368 = vmatprep.subr.mxu0 0.0
  %369 = vmatpush1.msra.mxu0 0.0
  %370 = vmatprep.subr.mxu0 0.0
  %371 = vmatpush1.msra.mxu0 0.0
  %372 = vmatprep.subr.mxu0 0.0
  %373 = vmatpush1.msra.mxu0 0.0
  %374 = vmatprep.subr.mxu0 0.0
  %375 = vmatpush1.msra.mxu0 0.0
  %376 = vmatprep.subr.mxu0 0.0
  %377 = vmatpush1.msra.mxu0 0.0
  %378 = vmatprep.subr.mxu0 0.0
  %379 = vmatpush1.msra.mxu0 0.0
  %380 = vmatprep.subr.mxu0 0.0
  %381 = vmatpush1.msra.mxu0 0.0
  %382 = vmatprep.subr.mxu0 0.0
  %383 = vmatpush1.msra.mxu0 0.0
  %384 = vmatprep.subr.mxu0 0.0
  %385 = vmatpush1.msra.mxu0 0.0
  %386 = vmatprep.subr.mxu0 0.0
  %387 = vmatpush1.msra.mxu0 0.0
  %388 = vmatprep.subr.mxu0 0.0
  %389 = vmatpush1.msra.mxu0 0.0
  %390 = vmatprep.subr.mxu0 0.0
  %391 = vmatpush1.msra.mxu0 0.0
  %392 = vmatprep.subr.mxu0 0.0
  %393 = vmatpush1.msra.mxu0 0.0
  %394 = vmatprep.mubr.f32.mxu0 0.0
  %v395 = vand.u32 %v25, 4294901760
  %396 = vmatmul.mubr.f32.gmra.mrb[0].mxu0 %v395
  %v397 = vpop.f32.mrb[0].mxu0
  %v398 = vadd.f32 %v324, %v397
  %v399 = vpop.f32.mrb[0].mxu0
  %400 = vdwg.mxu0
  %401 = vmatprep.subr.mxu0 0.0
  %v402 = vand.u32 %v15, 4294901760
  %403 = vmatpush1.msra.mxu0 %v402
  %404 = vmatprep.subr.mxu0 0.0
  %405 = vmatpush1.msra.mxu0 0.0
  %406 = vmatprep.subr.mxu0 0.0
  %407 = vmatpush1.msra.mxu0 0.0
  %408 = vmatprep.subr.mxu0 0.0
  %409 = vmatpush1.msra.mxu0 0.0
  %410 = vmatprep.subr.mxu0 0.0
  %411 = vmatpush1.msra.mxu0 0.0
  %412 = vmatprep.subr.mxu0 0.0
  %413 = vmatpush1.msra.mxu0 0.0
  %414 = vmatprep.subr.mxu0 0.0
  %415 = vmatpush1.msra.mxu0 0.0
  %416 = vmatprep.subr.mxu0 0.0
  %417 = vmatpush1.msra.mxu0 0.0
  %418 = vmatprep.subr.mxu0 0.0
  %419 = vmatpush1.msra.mxu0 0.0
  %420 = vmatprep.subr.mxu0 0.0
  %421 = vmatpush1.msra.mxu0 0.0
  %422 = vmatprep.subr.mxu0 0.0
  %423 = vmatpush1.msra.mxu0 0.0
  %424 = vmatprep.subr.mxu0 0.0
  %425 = vmatpush1.msra.mxu0 0.0
  %426 = vmatprep.subr.mxu0 0.0
  %427 = vmatpush1.msra.mxu0 0.0
  %428 = vmatprep.subr.mxu0 0.0
  %429 = vmatpush1.msra.mxu0 0.0
  %430 = vmatprep.subr.mxu0 0.0
  %431 = vmatpush1.msra.mxu0 0.0
  %432 = vmatprep.subr.mxu0 0.0
  %433 = vmatpush1.msra.mxu0 0.0
  %434 = vmatprep.subr.mxu0 0.0
  %435 = vmatpush1.msra.mxu0 0.0
  %436 = vmatprep.subr.mxu0 0.0
  %437 = vmatpush1.msra.mxu0 0.0
  %438 = vmatprep.subr.mxu0 0.0
  %439 = vmatpush1.msra.mxu0 0.0
  %440 = vmatprep.subr.mxu0 0.0
  %441 = vmatpush1.msra.mxu0 0.0
  %442 = vmatprep.subr.mxu0 0.0
  %443 = vmatpush1.msra.mxu0 0.0
  %444 = vmatprep.subr.mxu0 0.0
  %445 = vmatpush1.msra.mxu0 0.0
  %446 = vmatprep.subr.mxu0 0.0
  %447 = vmatpush1.msra.mxu0 0.0
  %448 = vmatprep.subr.mxu0 0.0
  %449 = vmatpush1.msra.mxu0 0.0
  %450 = vmatprep.subr.mxu0 0.0
  %451 = vmatpush1.msra.mxu0 0.0
  %452 = vmatprep.subr.mxu0 0.0
  %453 = vmatpush1.msra.mxu0 0.0
  %454 = vmatprep.subr.mxu0 0.0
  %455 = vmatpush1.msra.mxu0 0.0
  %456 = vmatprep.subr.mxu0 0.0
  %457 = vmatpush1.msra.mxu0 0.0
  %458 = vmatprep.subr.mxu0 0.0
  %459 = vmatpush1.msra.mxu0 0.0
  %460 = vmatprep.subr.mxu0 0.0
  %461 = vmatpush1.msra.mxu0 0.0
  %462 = vmatprep.subr.mxu0 0.0
  %463 = vmatpush1.msra.mxu0 0.0
  %464 = vmatprep.subr.mxu0 0.0
  %465 = vmatpush1.msra.mxu0 0.0
  %466 = vmatprep.mubr.f32.mxu0 0.0
  %v467 = vand.u32 %v25, 4294901760
  %468 = vmatmul.mubr.f32.gmra.mrb[0].mxu0 %v467
  %v469 = vpop.f32.mrb[0].mxu0
  %v470 = vadd.f32 %v398, %v469
  %v471 = vpop.f32.mrb[0].mxu0
  %472 = vdwg.mxu0
  %vm473 = vcmask 326656
  %474 = vst.msk [vmem:[%s3] sm:$0xff] %vm473, %v470
  // Predicated region
  $region14: #{conv_transpose1d_forward.1} parent=0 // pred_check
    _
  $region15: #{conv_transpose1d_forward.1} parent=0 // pred_check_branch
    %476 = sbr.rel (0) target = $region17
  $region16: #{conv_transpose1d_forward.1} parent=0 // pred_region
    _
  $region17: #{conv_transpose1d_forward.1} parent=0 // pred_fallthru
    _
  // Predicated region
  $region18: #{conv_transpose1d_forward.1} parent=0 // pred_check
    _
  $region19: #{conv_transpose1d_forward.1} parent=0 // pred_check_branch
    %478 = sbr.rel (0) target = $region21
  $region20: #{conv_transpose1d_forward.1} parent=0 // pred_region
    _
  $region21: #{conv_transpose1d_forward.1} parent=0 // pred_fallthru
    _

</llo_original>
